<compile_context>
chip_gen: v5e
topology: v5e:2x2
jax: 0.10.0
libtpu: 0.0.40
codegen_flags: <defaults>
</compile_context>

<pallas_src>
import functools

import jax
import jax.numpy as jnp
from jax.experimental import pallas as pl
from jax.experimental.pallas import tpu as pltpu


def _round_up(x, m):
    return (x + m - 1) // m * m


def _head_kernel(*refs, n_nodes, block_n, weighted, weights_are_log):
    """Segment pooling (weighted or mean) + 2-layer MLP with on-chip accumulation.

    refs (weighted):   x(TN,D), wts(1,TN), seg(1,TN), w1(D,D), b1(1,D),
                       w2(D,Opad), b2(1,Opad), out(Bpad,Opad), acc, den
    refs (unweighted): same without the wts ref.
    """
    if weighted:
        (x_ref, wts_ref, seg_ref, w1_ref, b1_ref, w2_ref, b2_ref,
         out_ref, acc_ref, den_ref) = refs
    else:
        (x_ref, seg_ref, w1_ref, b1_ref, w2_ref, b2_ref,
         out_ref, acc_ref, den_ref) = refs

    n = pl.program_id(0)
    n_last = pl.num_programs(0) - 1
    b_pad = acc_ref.shape[0]

    @pl.when(n == 0)
    def _init():
        acc_ref[...] = jnp.zeros_like(acc_ref)
        den_ref[...] = jnp.zeros_like(den_ref)

    seg = seg_ref[...]                                             # (1, TN) i32
    rows = jax.lax.broadcasted_iota(jnp.int32, (b_pad, block_n), 0)
    mask = rows == seg                                             # (B_pad, TN)

    x_t = x_ref[...]                                               # (TN, D), native dtype
    ragged = (n_nodes % block_n) != 0                              # static
    if ragged:
        # Mask the unspecified tail of the last partial tile.
        col = jax.lax.broadcasted_iota(jnp.int32, (1, block_n), 1) + n * block_n
        valid = col < n_nodes                                      # (1, TN)
        mask = jnp.logical_and(mask, valid)
        valid_rows = (jax.lax.broadcasted_iota(jnp.int32, (block_n, 1), 0)
                      + n * block_n) < n_nodes
        x_t = jnp.where(valid_rows, x_t, jnp.zeros_like(x_t))      # kill NaN garbage

    mask_f = mask.astype(jnp.float32)

    if weighted:
        wts = wts_ref[...]                                         # (1, TN) f32
        if weights_are_log:
            wts = jnp.exp(wts)                                     # EUP, f32
        if ragged:
            wts = jnp.where(valid, wts, 0.0)
        assign = (mask_f * wts).astype(x_t.dtype)                  # weights scattered
        den_ref[...] += jnp.sum(wts)                               # global prob mass
    else:
        assign = mask_f.astype(x_t.dtype)
        den_ref[...] += jnp.sum(mask_f, axis=1, keepdims=True)     # per-graph counts

    # (B_pad, TN) @ (TN, D) on the MXU, f32 accumulation across grid steps.
    acc_ref[...] += jnp.dot(assign, x_t, preferred_element_type=jnp.float32)

    @pl.when(n == n_last)
    def _finalize():
        denom = den_ref[...]
        if not weighted:
            denom = jnp.maximum(denom, 1.0)                        # empty-graph guard
        # exact reciprocal keeps the f32 reference check tight; approx=True is an
        # option when downstream tolerance permits (tiny (B_pad,1) op either way).
        inv = pl.reciprocal(denom, approx=False)
        pooled = acc_ref[...] * inv                                # (B_pad, D) f32
        h = jnp.dot(pooled, w1_ref[...],
                    preferred_element_type=jnp.float32) + b1_ref[...]
        h = jnp.maximum(h, 0.0)
        out = jnp.dot(h, w2_ref[...],
                      preferred_element_type=jnp.float32) + b2_ref[...]
        out_ref[...] = out.astype(out_ref.dtype)                   # lane-dense store


def weighted_mean_pool_graph_head(x, batch_idx, params, num_graphs,
                                  node_logprob=None, node_prob=None, y=None,
                                  block_n=None):
    """JAX wrapper mirroring WeightedMeanPoolGraphHead.forward(batch)."""
    N, D = x.shape
    w1, b1, w2, b2 = params
    O = w2.shape[1]

    # Padded geometry: 8-sublane graph rows, 128-lane MLP output.
    b_pad = max(8, _round_up(num_graphs, 8))
    o_pad = max(128, _round_up(O, 128))

    if node_logprob is not None:
        wts, weighted, is_log = node_logprob, True, True
    elif node_prob is not None:
        wts, weighted, is_log = node_prob, True, False
    else:
        wts, weighted, is_log = None, False, False

    # Node-axis tile: budget double-buffered x tiles for the tightest scoped-VMEM
    # targets (v5e 16 MiB default / v7x 32 MiB of 64 MiB physical).
    if block_n is None:
        block_n = 2048
        while block_n > 128 and 2 * block_n * D * x.dtype.itemsize > 8 * 1024 * 1024:
            block_n //= 2
    if N <= block_n:
        block_n = N                    # single tile: block == full array dims
    n_tiles = pl.cdiv(N, block_n)

    seg2d = batch_idx.reshape(1, N).astype(jnp.int32)
    w1f = w1.astype(jnp.float32)
    b1f = b1.reshape(1, D).astype(jnp.float32)
    w2f = jnp.zeros((D, o_pad), jnp.float32).at[:, :O].set(w2.astype(jnp.float32))
    b2f = jnp.zeros((1, o_pad), jnp.float32).at[:, :O].set(
        b2.reshape(1, O).astype(jnp.float32))

    kernel = functools.partial(_head_kernel, n_nodes=N, block_n=block_n,
                               weighted=weighted, weights_are_log=is_log)

    const = lambda n: (0, 0)
    in_specs = [pl.BlockSpec((block_n, D), lambda n: (n, 0))]      # x: streamed
    inputs = [x]                                                   # keep native dtype
    if weighted:
        in_specs.append(pl.BlockSpec((1, block_n), lambda n: (0, n)))
        inputs.append(wts.reshape(1, N).astype(jnp.float32))       # exp/scale in f32
    in_specs += [pl.BlockSpec((1, block_n), lambda n: (0, n)),     # seg ids
                 pl.BlockSpec((D, D), const),                      # resident MLP params
                 pl.BlockSpec((1, D), const),
                 pl.BlockSpec((D, o_pad), const),
                 pl.BlockSpec((1, o_pad), const)]
    inputs += [seg2d, w1f, b1f, w2f, b2f]

    cost = pl.CostEstimate(
        flops=2 * b_pad * N * D + 2 * b_pad * D * D + 2 * b_pad * D * o_pad,
        transcendentals=N if is_log else 0,
        bytes_accessed=(N * D * x.dtype.itemsize
                        + N * (4 + (4 if weighted else 0))
                        + (D * D + D + D * o_pad + o_pad) * 4
                        + b_pad * o_pad * 4))

    pred_padded = pl.pallas_call(
        kernel,
        out_shape=jax.ShapeDtypeStruct((b_pad, o_pad), jnp.float32),
        grid_spec=pltpu.PrefetchScalarGridSpec(
            num_scalar_prefetch=0,
            grid=(n_tiles,),
            in_specs=in_specs,
            out_specs=pl.BlockSpec((b_pad, o_pad), const),
            scratch_shapes=[pltpu.VMEM((b_pad, D), jnp.float32),   # pooled accumulator
                            pltpu.VMEM((b_pad, 1), jnp.float32)],  # sum(w) / counts
        ),
        compiler_params=pltpu.CompilerParams(
            dimension_semantics=("arbitrary",),
            vmem_limit_bytes=32 * 1024 * 1024),
        cost_estimate=cost,
    )(*inputs)

    pred = pred_padded[:num_graphs, :O]
    # _apply_index: (batch.graph_feature, batch.y)
    return pred, y


def _reference(x, batch_idx, params, num_graphs, node_logprob=None,
               node_prob=None):
    """Pure-JAX reference of the PyTorch forward, for correctness checking."""
    w1, b1, w2, b2 = params
    xf = x.astype(jnp.float32)
    if node_logprob is not None:
        p = jnp.exp(node_logprob)
        emb = jax.ops.segment_sum(xf * p[:, None], batch_idx, num_graphs)
        emb = emb / jnp.sum(p)
    elif node_prob is not None:
        emb = jax.ops.segment_sum(xf * node_prob[:, None], batch_idx, num_graphs)
        emb = emb / jnp.sum(node_prob)
    else:
        s = jax.ops.segment_sum(xf, batch_idx, num_graphs)
        c = jax.ops.segment_sum(jnp.ones_like(batch_idx, jnp.float32),
                                batch_idx, num_graphs)
        emb = s / jnp.maximum(c, 1.0)[:, None]
    h = jnp.maximum(emb @ w1 + b1, 0.0)
    return h @ w2 + b2


if __name__ == "__main__":
    key = jax.random.PRNGKey(0)
    k_x, k_lp, k_w1, k_b1, k_w2, k_b2, k_y, k_x2, k_p2 = jax.random.split(key, 9)

    # --- Test 1/2: 4 graphs x 8 nodes, dim_in=32, dim_out=8 (f32) -----------
    num_graphs, nodes_per_graph, dim_in, dim_out = 4, 8, 32, 8
    N = num_graphs * nodes_per_graph

    x = jax.random.normal(k_x, (N, dim_in), dtype=jnp.float32)
    node_logprob = -jnp.abs(jax.random.normal(k_lp, (N,), dtype=jnp.float32))
    batch_idx = jnp.repeat(jnp.arange(num_graphs, dtype=jnp.int32),
                           nodes_per_graph)
    y = jax.random.randint(k_y, (num_graphs,), 0, 2).astype(jnp.float32)

    scale1 = 1.0 / jnp.sqrt(jnp.float32(dim_in))
    w1 = jax.random.uniform(k_w1, (dim_in, dim_in), jnp.float32, -scale1, scale1)
    b1 = jax.random.uniform(k_b1, (dim_in,), jnp.float32, -scale1, scale1)
    w2 = jax.random.uniform(k_w2, (dim_in, dim_out), jnp.float32, -scale1, scale1)
    b2 = jax.random.uniform(k_b2, (dim_out,), jnp.float32, -scale1, scale1)
    params = (w1, b1, w2, b2)

    # log-prob weighted branch (f32)
    pred, label = weighted_mean_pool_graph_head(
        x, batch_idx, params, num_graphs, node_logprob=node_logprob, y=y)
    pred = jax.block_until_ready(pred)
    ref = _reference(x, batch_idx, params, num_graphs, node_logprob=node_logprob)
    assert pred.shape == (num_graphs, dim_out)
    assert jnp.allclose(pred, ref, atol=1e-4, rtol=1e-4)

    # global_mean_pool branch (no weights DMA'd at all)
    pred_mean, _ = weighted_mean_pool_graph_head(
        x, batch_idx, params, num_graphs, y=y)
    pred_mean = jax.block_until_ready(pred_mean)
    ref_mean = _reference(x, batch_idx, params, num_graphs)
    assert jnp.allclose(pred_mean, ref_mean, atol=1e-4, rtol=1e-4)

    # --- Test 3: multi-tile grid + ragged tail masking (node_prob branch) ---
    ng2, npg2 = 5, 40
    N2 = ng2 * npg2                                   # 200 nodes, block_n=128 -> 2 tiles
    x2 = jax.random.normal(k_x2, (N2, dim_in), dtype=jnp.float32)
    prob2 = jax.random.uniform(k_p2, (N2,), jnp.float32, 0.1, 1.0)
    batch_idx2 = jnp.repeat(jnp.arange(ng2, dtype=jnp.int32), npg2)
    pred2, _ = weighted_mean_pool_graph_head(
        x2, batch_idx2, params, ng2, node_prob=prob2, y=None, block_n=128)
    pred2 = jax.block_until_ready(pred2)
    ref2 = _reference(x2, batch_idx2, params, ng2, node_prob=prob2)
    assert pred2.shape == (ng2, dim_out)
    assert jnp.allclose(pred2, ref2, atol=1e-4, rtol=1e-4)

    # --- Test 4: bf16 node features (half the HBM bytes on the dominant read) ---
    pred_bf, _ = weighted_mean_pool_graph_head(
        x.astype(jnp.bfloat16), batch_idx, params, num_graphs,
        node_logprob=node_logprob, y=y)
    pred_bf = jax.block_until_ready(pred_bf)
    assert jnp.allclose(pred_bf, ref, atol=3e-2, rtol=3e-2)

    print("KERNEL_OK")
</pallas_src>

<mosaic_0001>
module attributes {stable_mosaic.version = 11 : i64} {
  func.func @_head_kernel(%arg0: i32, %arg1: memref<32x32xf32, #tpu.memory_space<vmem>>, %arg2: memref<1x32xf32, #tpu.memory_space<vmem>>, %arg3: memref<1x32xi32, #tpu.memory_space<vmem>>, %arg4: memref<32x32xf32, #tpu.memory_space<vmem>>, %arg5: memref<1x32xf32, #tpu.memory_space<vmem>>, %arg6: memref<32x128xf32, #tpu.memory_space<vmem>>, %arg7: memref<1x128xf32, #tpu.memory_space<vmem>>, %arg8: memref<8x128xf32, #tpu.memory_space<vmem>>, %arg9: memref<8x32xf32, #tpu.memory_space<vmem>>, %arg10: memref<8x1xf32, #tpu.memory_space<vmem>>) attributes {dimension_semantics = [#tpu.dimension_semantics<arbitrary>], iteration_bounds = array<i64: 1>, scalar_prefetch = 0 : i64, scratch_operands = 2 : i64, tpu.core_type = #tpu.core_type<tc>, window_params = [{transform_indices = @transform_0, window_bounds = array<i64: 32, 32>}, {transform_indices = @transform_1, window_bounds = array<i64: 1, 32>}, {transform_indices = @transform_2, window_bounds = array<i64: 1, 32>}, {pipeline_mode = #tpu.pipeline_mode<synchronous>, transform_indices = @transform_3, window_bounds = array<i64: 32, 32>}, {pipeline_mode = #tpu.pipeline_mode<synchronous>, transform_indices = @transform_4, window_bounds = array<i64: 1, 32>}, {pipeline_mode = #tpu.pipeline_mode<synchronous>, transform_indices = @transform_5, window_bounds = array<i64: 32, 128>}, {pipeline_mode = #tpu.pipeline_mode<synchronous>, transform_indices = @transform_6, window_bounds = array<i64: 1, 128>}, {pipeline_mode = #tpu.pipeline_mode<synchronous>, transform_indices = @transform_7, window_bounds = array<i64: 8, 128>}]} {
    %c0_i32 = arith.constant 0 : i32
    %0 = arith.cmpi eq, %arg0, %c0_i32 : i32
    %1 = arith.extui %0 : i1 to i32
    %c0_i32_0 = arith.constant 0 : i32
    %2 = arith.cmpi ne, %1, %c0_i32_0 : i32
    scf.if %2 {
      %cst_17 = arith.constant 0.000000e+00 : f32
      %29 = vector.broadcast %cst_17 : f32 to vector<8x32xf32>
      %c0_18 = arith.constant 0 : index
      %c0_19 = arith.constant 0 : index
      %30 = vector.load %arg9[%c0_18, %c0_19] : memref<8x32xf32, #tpu.memory_space<vmem>>, vector<8x32xf32>
      tpu.vector_store %arg9[%c0_18, %c0_19], %29 {strides = array<i32>} : memref<8x32xf32, #tpu.memory_space<vmem>>, vector<8x32xf32>,
      %cst_20 = arith.constant 0.000000e+00 : f32
      %31 = vector.broadcast %cst_20 : f32 to vector<8x1xf32>
      %c0_21 = arith.constant 0 : index
      %c0_22 = arith.constant 0 : index
      %32 = vector.load %arg10[%c0_21, %c0_22] : memref<8x1xf32, #tpu.memory_space<vmem>>, vector<8x1xf32>
      tpu.vector_store %arg10[%c0_21, %c0_22], %31 {strides = array<i32>} : memref<8x1xf32, #tpu.memory_space<vmem>>, vector<8x1xf32>,
    } else {
    }
    %c0 = arith.constant 0 : index
    %c0_1 = arith.constant 0 : index
    %3 = vector.load %arg3[%c0, %c0_1] : memref<1x32xi32, #tpu.memory_space<vmem>>, vector<1x32xi32>
    %4 = tpu.iota {dimensions = array<i32: 0>} : vector<8x32xi32>
    %5 = vector.broadcast %3 : vector<1x32xi32> to vector<8x32xi32>
    %6 = arith.cmpi eq, %4, %5 : vector<8x32xi32>
    %c0_2 = arith.constant 0 : index
    %c0_3 = arith.constant 0 : index
    %7 = vector.load %arg1[%c0_2, %c0_3] : memref<32x32xf32, #tpu.memory_space<vmem>>, vector<32x32xf32>
    %8 = arith.extui %6 : vector<8x32xi1> to vector<8x32xi32>
    %9 = arith.sitofp %8 : vector<8x32xi32> to vector<8x32xf32>
    %c0_4 = arith.constant 0 : index
    %c0_5 = arith.constant 0 : index
    %10 = vector.load %arg2[%c0_4, %c0_5] : memref<1x32xf32, #tpu.memory_space<vmem>>, vector<1x32xf32>
    %11 = math.exp %10 : vector<1x32xf32>
    %12 = vector.broadcast %11 : vector<1x32xf32> to vector<8x32xf32>
    %13 = arith.mulf %9, %12 : vector<8x32xf32>
    %c0_6 = arith.constant 0 : index
    %c0_7 = arith.constant 0 : index
    %14 = vector.load %arg10[%c0_6, %c0_7] : memref<8x1xf32, #tpu.memory_space<vmem>>, vector<8x1xf32>
    %15 = vector.shape_cast %11 : vector<1x32xf32> to vector<1x1x32xf32>
    %cst = arith.constant dense<0.000000e+00> : vector<1xf32>
    %16 = vector.multi_reduction <add>, %15, %cst [1, 2] : vector<1x1x32xf32> to vector<1xf32>
    %17 = vector.shape_cast %16 : vector<1xf32> to vector<1x1x1xf32>
    %18 = vector.extract %17[0, 0, 0] : f32 from vector<1x1x1xf32>
    %19 = vector.broadcast %18 : f32 to vector<8x1xf32>
    %20 = arith.addf %14, %19 : vector<8x1xf32>
    %c0_8 = arith.constant 0 : index
    %c0_9 = arith.constant 0 : index
    %21 = vector.load %arg10[%c0_8, %c0_9] : memref<8x1xf32, #tpu.memory_space<vmem>>, vector<8x1xf32>
    tpu.vector_store %arg10[%c0_8, %c0_9], %20 {strides = array<i32>} : memref<8x1xf32, #tpu.memory_space<vmem>>, vector<8x1xf32>,
    %c0_10 = arith.constant 0 : index
    %c0_11 = arith.constant 0 : index
    %22 = vector.load %arg9[%c0_10, %c0_11] : memref<8x32xf32, #tpu.memory_space<vmem>>, vector<8x32xf32>
    %cst_12 = arith.constant dense<0.000000e+00> : vector<8x32xf32>
    %23 = tpu.matmul %13, %7, %cst_12 {dimension_numbers = #tpu.dot_dimension_numbers<[1], [0], [0], [1], [0, 0, 1, 1], [], []>} : vector<8x32xf32>, vector<32x32xf32>, vector<8x32xf32> -> vector<8x32xf32>
    %24 = arith.addf %22, %23 : vector<8x32xf32>
    %c0_13 = arith.constant 0 : index
    %c0_14 = arith.constant 0 : index
    %25 = vector.load %arg9[%c0_13, %c0_14] : memref<8x32xf32, #tpu.memory_space<vmem>>, vector<8x32xf32>
    tpu.vector_store %arg9[%c0_13, %c0_14], %24 {strides = array<i32>} : memref<8x32xf32, #tpu.memory_space<vmem>>, vector<8x32xf32>,
    %c0_i32_15 = arith.constant 0 : i32
    %26 = arith.cmpi eq, %arg0, %c0_i32_15 : i32
    %27 = arith.extui %26 : i1 to i32
    %c0_i32_16 = arith.constant 0 : i32
    %28 = arith.cmpi ne, %27, %c0_i32_16 : i32
    scf.if %28 {
      %c0_17 = arith.constant 0 : index
      %c0_18 = arith.constant 0 : index
      %29 = vector.load %arg10[%c0_17, %c0_18] : memref<8x1xf32, #tpu.memory_space<vmem>>, vector<8x1xf32>
      %30 = tpu.reciprocal %29 : vector<8x1xf32> -> vector<8x1xf32>
      %c0_19 = arith.constant 0 : index
      %c0_20 = arith.constant 0 : index
      %31 = vector.load %arg9[%c0_19, %c0_20] : memref<8x32xf32, #tpu.memory_space<vmem>>, vector<8x32xf32>
      %32 = vector.broadcast %30 : vector<8x1xf32> to vector<8x32xf32>
      %33 = arith.mulf %31, %32 : vector<8x32xf32>
      %c0_21 = arith.constant 0 : index
      %c0_22 = arith.constant 0 : index
      %34 = vector.load %arg4[%c0_21, %c0_22] : memref<32x32xf32, #tpu.memory_space<vmem>>, vector<32x32xf32>
      %cst_23 = arith.constant dense<0.000000e+00> : vector<8x32xf32>
      %35 = tpu.matmul %33, %34, %cst_23 {dimension_numbers = #tpu.dot_dimension_numbers<[1], [0], [0], [1], [0, 0, 1, 1], [], []>} : vector<8x32xf32>, vector<32x32xf32>, vector<8x32xf32> -> vector<8x32xf32>
      %c0_24 = arith.constant 0 : index
      %c0_25 = arith.constant 0 : index
      %36 = vector.load %arg5[%c0_24, %c0_25] : memref<1x32xf32, #tpu.memory_space<vmem>>, vector<1x32xf32>
      %37 = vector.broadcast %36 : vector<1x32xf32> to vector<8x32xf32>
      %38 = arith.addf %35, %37 : vector<8x32xf32>
      %cst_26 = arith.constant 0.000000e+00 : f32
      %39 = vector.broadcast %cst_26 : f32 to vector<8x32xf32>
      %40 = arith.maximumf %38, %39 : vector<8x32xf32>
      %c0_27 = arith.constant 0 : index
      %c0_28 = arith.constant 0 : index
      %41 = vector.load %arg6[%c0_27, %c0_28] : memref<32x128xf32, #tpu.memory_space<vmem>>, vector<32x128xf32>
      %cst_29 = arith.constant dense<0.000000e+00> : vector<8x128xf32>
      %42 = tpu.matmul %40, %41, %cst_29 {dimension_numbers = #tpu.dot_dimension_numbers<[1], [0], [0], [1], [0, 0, 1, 1], [], []>} : vector<8x32xf32>, vector<32x128xf32>, vector<8x128xf32> -> vector<8x128xf32>
      %c0_30 = arith.constant 0 : index
      %c0_31 = arith.constant 0 : index
      %43 = vector.load %arg7[%c0_30, %c0_31] : memref<1x128xf32, #tpu.memory_space<vmem>>, vector<1x128xf32>
      %44 = vector.broadcast %43 : vector<1x128xf32> to vector<8x128xf32>
      %45 = arith.addf %42, %44 : vector<8x128xf32>
      %c0_32 = arith.constant 0 : index
      %c0_33 = arith.constant 0 : index
      %46 = vector.load %arg8[%c0_32, %c0_33] : memref<8x128xf32, #tpu.memory_space<vmem>>, vector<8x128xf32>
      tpu.vector_store %arg8[%c0_32, %c0_33], %45 {strides = array<i32>} : memref<8x128xf32, #tpu.memory_space<vmem>>, vector<8x128xf32>,
    } else {
    }
    return
  }
  func.func @transform_0(%arg0: i32) -> (i32, i32) {
    %c0_i32 = arith.constant 0 : i32
    %c0_i32_0 = arith.constant 0 : i32
    return %arg0, %c0_i32 : i32, i32
  }
  func.func @transform_1(%arg0: i32) -> (i32, i32) {
    %c0_i32 = arith.constant 0 : i32
    %c0_i32_0 = arith.constant 0 : i32
    return %c0_i32, %arg0 : i32, i32
  }
  func.func @transform_2(%arg0: i32) -> (i32, i32) {
    %c0_i32 = arith.constant 0 : i32
    %c0_i32_0 = arith.constant 0 : i32
    return %c0_i32, %arg0 : i32, i32
  }
  func.func @transform_3(%arg0: i32) -> (i32, i32) {
    %c0_i32 = arith.constant 0 : i32
    %c0_i32_0 = arith.constant 0 : i32
    %c0_i32_1 = arith.constant 0 : i32
    return %c0_i32, %c0_i32_0 : i32, i32
  }
  func.func @transform_4(%arg0: i32) -> (i32, i32) {
    %c0_i32 = arith.constant 0 : i32
    %c0_i32_0 = arith.constant 0 : i32
    %c0_i32_1 = arith.constant 0 : i32
    return %c0_i32, %c0_i32_0 : i32, i32
  }
  func.func @transform_5(%arg0: i32) -> (i32, i32) {
    %c0_i32 = arith.constant 0 : i32
    %c0_i32_0 = arith.constant 0 : i32
    %c0_i32_1 = arith.constant 0 : i32
    return %c0_i32, %c0_i32_0 : i32, i32
  }
  func.func @transform_6(%arg0: i32) -> (i32, i32) {
    %c0_i32 = arith.constant 0 : i32
    %c0_i32_0 = arith.constant 0 : i32
    %c0_i32_1 = arith.constant 0 : i32
    return %c0_i32, %c0_i32_0 : i32, i32
  }
  func.func @transform_7(%arg0: i32) -> (i32, i32) {
    %c0_i32 = arith.constant 0 : i32
    %c0_i32_0 = arith.constant 0 : i32
    %c0_i32_1 = arith.constant 0 : i32
    return %c0_i32, %c0_i32_0 : i32, i32
  }
}

</mosaic_0001>

<llo_original>
// kernel: tpu_custom_call.1
$region0: #{tpu_custom_call.1}
  #allocation0 [shape = 'u32[]', space=smem, size = 0x4, offset = 0x4, fixed_abs, tag = 'smem constant byte address 0x4 - core index']
  #allocation1 [shape = 'u32[72,128]{1,0:T(1,128)}', space=vmem, size = 0x9000, scoped, tag = 'internal scratch']
  #allocation2 [shape = 'f32[8,32]{1,0:T(8,128)}', space=vmem, size = 0x1000, scoped, tag = 'scratch operand']
  #allocation3 [shape = 'f32[8,1]{1,0:T(8,128)}', space=vmem, size = 0x1000, scoped, tag = 'scratch operand']
  %s0 = inlined_call_operand.hbm [shape: f32[32,32], index: 0, kind: input, shape index: {}]
  %s1 = inlined_call_operand.hbm [shape: f32[1,32], index: 1, kind: input, shape index: {}]
  %s2 = inlined_call_operand.vmem [shape: s32[1,32], index: 2, kind: input, shape index: {}]
  %s3 = inlined_call_operand.hbm [shape: f32[32,32], index: 3, kind: input, shape index: {}]
  %s4 = inlined_call_operand.vmem [shape: f32[1,32], index: 4, kind: input, shape index: {}]
  %s5 = inlined_call_operand.hbm [shape: f32[32,128], index: 5, kind: input, shape index: {}]
  %s6 = inlined_call_operand.vmem [shape: f32[1,128], index: 6, kind: input, shape index: {}]
  %s7 = inlined_call_operand.hbm [shape: f32[8,128], index: 7, kind: output, shape index: {}]
  %s8 = sld [smem:[#allocation0]]
  $region62: #{tpu_custom_call.1} parent=0
    _
  %s10 = ssub.s32 1, %s8
  %s11 = scalar_select 0, %s10, %s8
  $region1: #{tpu_custom_call.1} parent=0
    #allocation4 [shape = 'u8[16384]{0}', space=vmem, size = 0x4000, scoped, tag = 'input window, operand 0, single buffered']
    #allocation5 [shape = 's32[1]{0}', space=sflag, size = 0x4, scoped, tag = 'scoped memory for tpu_custom_call.1']
    #allocation6 [shape = 's32[1]{0}', space=sflag, size = 0x4, scoped, tag = 'scoped memory for tpu_custom_call.1']
    #allocation7 [shape = 'u8[512]{0}', space=vmem, size = 0x400, scoped, tag = 'input window, operand 1, single buffered']
    #allocation8 [shape = 's32[1]{0}', space=sflag, size = 0x4, scoped, tag = 'scoped memory for tpu_custom_call.1']
    #allocation9 [shape = 'u8[16384]{0}', space=vmem, size = 0x4000, scoped, tag = 'input window, operand 3, single buffered']
    #allocation10 [shape = 'u8[16384]{0}', space=vmem, size = 0x4000, scoped, tag = 'input window, operand 5, single buffered']
    #allocation11 [shape = 's32[1]{0}', space=sflag, size = 0x4, scoped, tag = 'scoped memory for tpu_custom_call.1']
    #allocation12 [shape = 'u8[4096]{0}', space=vmem, size = 0x1000, scoped, tag = 'output window, operand 0, single buffered']
    %12 = vsyncpa [#allocation5], 0
    %13 = vsyncpa [#allocation8], 0
    %14 = vsyncpa [#allocation11], 0
    %15 = vsyncpa [#allocation6], 0
    // Predicated region
    $region2: #{tpu_custom_call.1} parent=1 // pred_check
      _
    $region3: #{tpu_custom_call.1} parent=1 // pred_check_branch
      %17 = sbr.rel (0) target = $region5
    $region4: #{tpu_custom_call.1} parent=1 // pred_region
      %19 = vsyncadd [#allocation5], 0
      %s20 = sshll.u32 %s0, 4
      %s21 = int_to_ptr.hbm [resolvable:$true] %s20
      %s22 = sshll.u32 [#allocation4], 4
      %s23 = int_to_ptr.vmem [resolvable:$true] %s22
      %28 = dma.hbm_to_vmem [thread:$0]  %s21, 512, %s23, [#allocation5], 128, 128, 8
    $region5: #{tpu_custom_call.1} parent=1 // pred_fallthru
      _
    // Predicated region
    $region6: #{tpu_custom_call.1} parent=1 // pred_check
      _
    $region7: #{tpu_custom_call.1} parent=1 // pred_check_branch
      %30 = sbr.rel (0) target = $region9
    $region8: #{tpu_custom_call.1} parent=1 // pred_region
      %32 = vsyncadd [#allocation8], 0
      %s34 = sshll.u32 %s1, 4
      %s35 = int_to_ptr.hbm [resolvable:$true] %s34
      %s36 = sshll.u32 [#allocation7], 4
      %s37 = int_to_ptr.vmem [resolvable:$true] %s36
      %39 = dma.hbm_to_vmem [thread:$0]  %s35, 16, %s37, [#allocation8]
    $region9: #{tpu_custom_call.1} parent=1 // pred_fallthru
      _
    // Predicated region
    $region10: #{tpu_custom_call.1} parent=1 // pred_check
      _
    $region11: #{tpu_custom_call.1} parent=1 // pred_check_branch
      %41 = sbr.rel (0) target = $region13
    $region12: #{tpu_custom_call.1} parent=1 // pred_region
      _
    $region13: #{tpu_custom_call.1} parent=1 // pred_fallthru
      _
    // Predicated region
    $region14: #{tpu_custom_call.1} parent=1 // pred_check
      _
    $region15: #{tpu_custom_call.1} parent=1 // pred_check_branch
      %43 = sbr.rel (0) target = $region17
    $region16: #{tpu_custom_call.1} parent=1 // pred_region
      %45 = vsyncadd [#allocation8], 0
      %s46 = sshll.u32 %s3, 4
      %s47 = int_to_ptr.hbm [resolvable:$true] %s46
      %s48 = sshll.u32 [#allocation9], 4
      %s49 = int_to_ptr.vmem [resolvable:$true] %s48
      %54 = dma.hbm_to_vmem [thread:$0]  %s47, 512, %s49, [#allocation8], 128, 128, 8
    $region17: #{tpu_custom_call.1} parent=1 // pred_fallthru
      _
    // Predicated region
    $region18: #{tpu_custom_call.1} parent=1 // pred_check
      _
    $region19: #{tpu_custom_call.1} parent=1 // pred_check_branch
      %56 = sbr.rel (0) target = $region21
    $region20: #{tpu_custom_call.1} parent=1 // pred_region
      _
    $region21: #{tpu_custom_call.1} parent=1 // pred_fallthru
      _
    // Predicated region
    $region22: #{tpu_custom_call.1} parent=1 // pred_check
      _
    $region23: #{tpu_custom_call.1} parent=1 // pred_check_branch
      %58 = sbr.rel (0) target = $region25
    $region24: #{tpu_custom_call.1} parent=1 // pred_region
      %60 = vsyncadd [#allocation11], 0
      %s61 = sshll.u32 %s5, 4
      %s62 = int_to_ptr.hbm [resolvable:$true] %s61
      %s63 = sshll.u32 [#allocation10], 4
      %s64 = int_to_ptr.vmem [resolvable:$true] %s63
      %69 = dma.hbm_to_vmem [thread:$0]  %s62, 512, %s64, [#allocation11], 128, 128, 8
    $region25: #{tpu_custom_call.1} parent=1 // pred_fallthru
      _
    // Predicated region
    $region26: #{tpu_custom_call.1} parent=1 // pred_check
      _
    $region27: #{tpu_custom_call.1} parent=1 // pred_check_branch
      %71 = sbr.rel (0) target = $region29
    $region28: #{tpu_custom_call.1} parent=1 // pred_region
      _
    $region29: #{tpu_custom_call.1} parent=1 // pred_fallthru
      _
    // Predicated region
    $region30: #{tpu_custom_call.1} parent=1 // pred_check
      _
    $region31: #{tpu_custom_call.1} parent=1 // pred_check_branch
      %73 = sbr.rel (0) target = $region33
    $region32: #{tpu_custom_call.1} parent=1 // pred_region
      %75 = dma.done [#allocation5], 512
    $region33: #{tpu_custom_call.1} parent=1 // pred_fallthru
      _
    // Predicated region
    $region34: #{tpu_custom_call.1} parent=1 // pred_check
      _
    $region35: #{tpu_custom_call.1} parent=1 // pred_check_branch
      %77 = sbr.rel (0) target = $region37
    $region36: #{tpu_custom_call.1} parent=1 // pred_region
      %79 = dma.done [#allocation8], 16
    $region37: #{tpu_custom_call.1} parent=1 // pred_fallthru
      _
    // Predicated region
    $region38: #{tpu_custom_call.1} parent=1 // pred_check
      _
    $region39: #{tpu_custom_call.1} parent=1 // pred_check_branch
      %81 = sbr.rel (0) target = $region41
    $region40: #{tpu_custom_call.1} parent=1 // pred_region
      %83 = dma.done [#allocation8], 512
    $region41: #{tpu_custom_call.1} parent=1 // pred_fallthru
      _
    // Predicated region
    $region42: #{tpu_custom_call.1} parent=1 // pred_check
      _
    $region43: #{tpu_custom_call.1} parent=1 // pred_check_branch
      %85 = sbr.rel (0) target = $region45
    $region44: #{tpu_custom_call.1} parent=1 // pred_region
      %87 = dma.done [#allocation11], 512
    $region45: #{tpu_custom_call.1} parent=1 // pred_fallthru
      _
    %p88 = scmp.eq.s32.totalorder 0, 0
    // Predicated region
    $region46: #{tpu_custom_call.1} parent=1 // pred_check
      %p89 = pneg %p88
    $region47: #{tpu_custom_call.1} parent=1 // pred_check_branch
      %91 = sbr.rel (%p89) target = $region49
    $region48: #{tpu_custom_call.1} parent=1 // pred_region
      %vm92 = vcmask 261120
      %93 = vst.msk [vmem:[#allocation2] sm:$0xff] %vm92, 0.0
      %vm94 = vcmask 7168
      %95 = vst.msk [vmem:[#allocation3] sm:$0xff] %vm94, 0.0
    $region49: #{tpu_custom_call.1} parent=1 // pred_fallthru
      _
    %v96 = vld [vmem:[%s2] sm:$0x1]
    %v97 = vlaneseq
    %v98 = vshrl.u32 %v97, 7
    %v99 = vperm.slane %v96, 0
    %vm100 = vcmp.eq.s32.totalorder %v98, %v99
    %v101 = vld [vmem:[#allocation4] sm:$0xff]
    %v102 = vld [vmem:[#allocation4 + $0x8] sm:$0xff]
    %v103 = vld [vmem:[#allocation4 + $0x10] sm:$0xff]
    %v104 = vld [vmem:[#allocation4 + $0x18] sm:$0xff]
    %v105 = vsel %vm100, 1, 0
    %v106 = vcvt.s32.f32 %v105
    %v107 = vld [vmem:[#allocation7] sm:$0x1]
    %v108 = vmul.f32 %v107, 1.442695
    %v109 = vpow.pop %v108
    %v111 = vperm.slane %v109, 0
    %v113 = vmul.f32 %v106, %v111
    %v114 = vld [vmem:[#allocation3] sm:$0xff]
    %vm115 = vcmask 253952
    %v116 = vsel %vm115, %v109, 0.0
    %117 = vadd.xlane.f32.xlu0 %v116
    %v118 = vpop.xlane.xlu0 %117
    %v119 = vrot.slane %v118, 4
    %v120 = vadd.f32 %v118, %v119
    %v121 = vrot.slane %v120, 2
    %v122 = vadd.f32 %v120, %v121
    %v123 = vrot.slane %v122, 1
    %v124 = vadd.f32 %v122, %v123
    %s125 = vtos %v124
    %v126 = vstv %s125
    %v127 = vadd.f32 %v114, %v126
    %vm128 = vcmask 7168
    %129 = vst.msk [vmem:[#allocation3] sm:$0xff] %vm128, %v127
    %v130 = vld [vmem:[#allocation2] sm:$0xff]
    %vm131 = vcmask 261120
    %v133 = vsel %vm131, %v113, 0
    %135 = vmatpush.msra.mxu0 0.0
    %136 = vmatpush.msra.mxu0 0.0
    %137 = vmatpush.msra.mxu0 0.0
    %138 = vmatpush.msra.mxu0 0.0
    %139 = vmatpush.msra.mxu0 0.0
    %140 = vmatpush.msra.mxu0 0.0
    %141 = vmatpush.msra.mxu0 0.0
    %142 = vmatpush.msra.mxu0 0.0
    %143 = vmatpush.msra.mxu0 0.0
    %144 = vmatpush.msra.mxu0 0.0
    %145 = vmatpush.msra.mxu0 0.0
    %146 = vmatpush.msra.mxu0 0.0
    %147 = vmatpush.msra.mxu0 %v104
    %148 = vmatpush.msra.mxu0 %v103
    %149 = vmatpush.msra.mxu0 %v102
    %150 = vmatpush.msra.mxu0 %v101
    %151 = vmatmul.f32.gmra.mxu0 %v133
    %v152 = vpop.f32.mrf.mxu0
    %v153 = vadd.f32 0.0, %v152
    %154 = vdwg.mxu0
    %v155 = vadd.f32 %v130, %v153
    %156 = vst.msk [vmem:[#allocation2] sm:$0xff] %vm131, %v155
    // Predicated region
    $region50: #{tpu_custom_call.1} parent=1 // pred_check
      %p157 = pneg %p88
    $region51: #{tpu_custom_call.1} parent=1 // pred_check_branch
      %159 = sbr.rel (%p157) target = $region53
    $region52: #{tpu_custom_call.1} parent=1 // pred_region
      %v160 = vld [vmem:[#allocation3] sm:$0xff]
      %v161 = vrcp.pop %v160
      %v162 = vmul.f32 %v160, %v161
      %v163 = vsub.f32 1.0, %v162
      %v164 = vmul.f32 %v161, %v163
      %v165 = vadd.f32 %v161, %v164
      %vm166 = vweird.f32 %v160
      %vm167 = vweird.f32 %v161
      %vm168 = vmor %vm166, %vm167
      %v169 = vsel %vm168, %v161, %v165
      %v170 = vand.u32 2147483647, %v160
      %vm171 = vcmp.eq.f32.partialorder %v170, 8.507059e+37
      %v172 = vand.u32 %v160, 2147483648
      %v173 = vor.u32 1.1754944e-38, %v172
      %v174 = vsel %vm171, %v173, %v169
      %v175 = vld [vmem:[#allocation2] sm:$0xff]
      %177 = vset.pattern.permute.xlu0 0
      %178 = vperm.xlu0 %177, %v174
      %v179 = vpop.permute.xlu0 %178
      %v181 = vmul.f32 %v175, %v179
      %v182 = vld [vmem:[#allocation9] sm:$0xff]
      %v183 = vld [vmem:[#allocation9 + $0x8] sm:$0xff]
      %v184 = vld [vmem:[#allocation9 + $0x10] sm:$0xff]
      %v185 = vld [vmem:[#allocation9 + $0x18] sm:$0xff]
      %v186 = vld [vmem:[%s4] sm:$0x1]
      %v188 = vperm.slane %v186, 0
      %v191 = vsel %vm131, %v181, 0
      %193 = vmatpush.msra.mxu0 0.0
      %194 = vmatpush.msra.mxu0 0.0
      %195 = vmatpush.msra.mxu0 0.0
      %196 = vmatpush.msra.mxu0 0.0
      %197 = vmatpush.msra.mxu0 0.0
      %198 = vmatpush.msra.mxu0 0.0
      %199 = vmatpush.msra.mxu0 0.0
      %200 = vmatpush.msra.mxu0 0.0
      %201 = vmatpush.msra.mxu0 0.0
      %202 = vmatpush.msra.mxu0 0.0
      %203 = vmatpush.msra.mxu0 0.0
      %204 = vmatpush.msra.mxu0 0.0
      %205 = vmatpush.msra.mxu0 %v185
      %206 = vmatpush.msra.mxu0 %v184
      %207 = vmatpush.msra.mxu0 %v183
      %208 = vmatpush.msra.mxu0 %v182
      %209 = vmatmul.f32.gmra.mxu0 %v191
      %v210 = vpop.f32.mrf.mxu0
      %v211 = vadd.f32 %v188, %v210
      %212 = vdwg.mxu0
      %v213 = vmax.f32 %v211, 0.0
      %v214 = vld [vmem:[#allocation10] sm:$0xff]
      %v215 = vld [vmem:[#allocation10 + $0x8] sm:$0xff]
      %v216 = vld [vmem:[#allocation10 + $0x10] sm:$0xff]
      %v217 = vld [vmem:[#allocation10 + $0x18] sm:$0xff]
      %v218 = vld [vmem:[%s6] sm:$0x1]
      %v220 = vperm.slane %v218, 0
      %v223 = vsel %vm131, %v213, 0
      %225 = vmatpush.msra.mxu0 0.0
      %226 = vmatpush.msra.mxu0 0.0
      %227 = vmatpush.msra.mxu0 0.0
      %228 = vmatpush.msra.mxu0 0.0
      %229 = vmatpush.msra.mxu0 0.0
      %230 = vmatpush.msra.mxu0 0.0
      %231 = vmatpush.msra.mxu0 0.0
      %232 = vmatpush.msra.mxu0 0.0
      %233 = vmatpush.msra.mxu0 0.0
      %234 = vmatpush.msra.mxu0 0.0
      %235 = vmatpush.msra.mxu0 0.0
      %236 = vmatpush.msra.mxu0 0.0
      %237 = vmatpush.msra.mxu0 %v217
      %238 = vmatpush.msra.mxu0 %v216
      %239 = vmatpush.msra.mxu0 %v215
      %240 = vmatpush.msra.mxu0 %v214
      %241 = vmatmul.f32.gmra.mxu0 %v223
      %v242 = vpop.f32.mrf.mxu0
      %v243 = vadd.f32 %v220, %v242
      %244 = vdwg.mxu0
      %245 = vst [vmem:[#allocation12] sm:$0xff] %v243
    $region53: #{tpu_custom_call.1} parent=1 // pred_fallthru
      _
    // Predicated region
    $region54: #{tpu_custom_call.1} parent=1 // pred_check
      _
    $region55: #{tpu_custom_call.1} parent=1 // pred_check_branch
      %247 = sbr.rel (0) target = $region57
    $region56: #{tpu_custom_call.1} parent=1 // pred_region
      %249 = vsyncadd [#allocation6], 0
      %s251 = sshll.u32 [#allocation12], 4
      %s252 = int_to_ptr.vmem [resolvable:$true] %s251
      %s253 = sshll.u32 %s7, 4
      %s254 = int_to_ptr.hbm [resolvable:$true] %s253
      %256 = dma.vmem_to_hbm [thread:$0]  %s252, 128, %s254, [#allocation6]
    $region57: #{tpu_custom_call.1} parent=1 // pred_fallthru
      _
    // Predicated region
    $region58: #{tpu_custom_call.1} parent=1 // pred_check
      _
    $region59: #{tpu_custom_call.1} parent=1 // pred_check_branch
      %258 = sbr.rel (0) target = $region61
    $region60: #{tpu_custom_call.1} parent=1 // pred_region
      %260 = dma.done [#allocation6], 128
    $region61: #{tpu_custom_call.1} parent=1 // pred_fallthru
      _
    %261 = vsyncpa [#allocation5], 1
    %262 = vsyncpa [#allocation8], 1
    %263 = vsyncpa [#allocation11], 1
    %264 = vsyncpa [#allocation6], 1

</llo_original>
